<compile_context>
chip_gen: v6e
topology: v6e:2x2x1
jax: 0.10.0
libtpu: 0.0.40
codegen_flags: <defaults>
</compile_context>

<pallas_src>
import functools

import numpy as np
import jax
import jax.numpy as jnp
from jax.experimental import pallas as pl
from jax.experimental.pallas import tpu as pltpu

LN_EPS = 1e-5  # PyTorch nn.LayerNorm default


def _round_up(x, m):
    return (x + m - 1) // m * m


def _vmem_capacity_bytes():
    try:
        cap = getattr(pltpu.get_tpu_info(), "vmem_capacity_bytes", None)
        if cap:
            return int(cap)
    except Exception:
        pass
    return 64 * 1024 * 1024  # conservative fallback (v7x per-TC VMEM)


_VMEM_BYTES = _vmem_capacity_bytes()


def _pick_time_tile(T, target):
    """Multiple-of-8 time tile <= ~target; prefers a divisor of T (no tail pad)."""
    target = max(8, min(int(target), T))
    target = _round_up(target, 8)
    if target >= T:
        return _round_up(T, 8)
    lo = max(8, (target // 2) // 8 * 8)
    for tt in range(target, lo - 1, -8):
        if T % tt == 0:
            return tt
    return target  # wrapper pads T up to a multiple of this tile


def _tdnn_kernel(x_ref, halo_ref, w_ref, p_ref, o_ref, win_ref, lhs_ref=None, *,
                 k_taps, dilation, pad, win_off, mm_dtype, fused):
    """One (batch, time-tile) grid step.

    x_ref   : (tT, dim_i)           current time tile (input dtype)
    halo_ref: (2*pad, dim_i)        [left halo ; right halo], zeros outside [0, T)
    w_ref   : (K*dim_i, dim_o)      fused path  OR  (K, dim_i, dim_o) loop path
    p_ref   : (3, dim_o)            [conv bias ; ln gamma ; ln beta]  (f32)
    o_ref   : (tT, dim_o)
    win_ref : (win_off + tT + pad, dim_i) mm_dtype scratch; the bulk copy lands
              at the sublane-aligned offset `win_off` (= round_up(pad, 8)).
    lhs_ref : (tT, K*dim_i)         mm_dtype im2col scratch (fused path only)
    """
    tT, dim_i = x_ref.shape

    # ---- build the halo'd window once, directly in matmul dtype ----
    win_ref[pl.ds(win_off - pad, pad), :] = (
        halo_ref[pl.ds(0, pad), :].astype(mm_dtype))
    win_ref[pl.ds(win_off, tT), :] = x_ref[...].astype(mm_dtype)  # aligned bulk vst
    win_ref[pl.ds(win_off + tT, pad), :] = (
        halo_ref[pl.ds(pad, pad), :].astype(mm_dtype))

    # ---- Conv1d ----
    if fused:
        # im2col: one deep MXU contraction over K*dim_i.
        # TODO(synk): optionally lane-pad each tap slot to 128 (with zeroed
        # weight rows) to make these stores unmasked on v5e; needs a safe
        # zero-init of the padding lanes under megacore sharding.
        for k in range(k_taps):
            lhs_ref[:, pl.ds(k * dim_i, dim_i)] = (
                win_ref[pl.ds(win_off - pad + k * dilation, tT), :])
        acc = jnp.dot(lhs_ref[...], w_ref[...],
                      preferred_element_type=jnp.float32)
    else:
        acc = jnp.zeros((tT, o_ref.shape[-1]), jnp.float32)
        for k in range(k_taps):
            acc = acc + jnp.dot(
                win_ref[pl.ds(win_off - pad + k * dilation, tT), :],
                w_ref[k],
                preferred_element_type=jnp.float32)

    # ---- bias + ReLU ----
    p = p_ref[...]                                  # (3, dim_o) f32
    acc = jnp.maximum(acc + p[0:1, :], 0.0)

    # ---- LayerNorm over dim_o (two-pass statistics, f32) ----
    mean = jnp.mean(acc, axis=-1, keepdims=True)
    cen = acc - mean
    var = jnp.mean(cen * cen, axis=-1, keepdims=True)
    y = cen * jax.lax.rsqrt(var + LN_EPS)
    y = y * p[1:2, :] + p[2:3, :]

    o_ref[...] = y.astype(o_ref.dtype)


@functools.partial(
    jax.jit,
    static_argnames=("half_context", "dilation", "time_tile", "matmul_dtype"))
def tdnn_forward(features, lens, conv_w, conv_b, ln_gamma, ln_beta, *,
                 half_context=1, dilation=1, time_tile=None,
                 matmul_dtype=jnp.bfloat16):
    """features: (B, T, dim_i); lens: (B,); conv_w: (dim_o, dim_i, K) (PyTorch layout).

    Returns (output (B, T, dim_o), lens * T_out / T). stride=1 (module default).
    """
    B, T, dim_i = features.shape
    dim_o, dim_i_w, K = conv_w.shape
    assert dim_i_w == dim_i, "conv weight dim_i mismatch"
    assert K == 2 * half_context + 1, "kernel size must be 2*half_context+1"
    assert half_context >= 1 and dilation >= 1
    pad = half_context * dilation
    T_out = T  # stride == 1 and padding == dilation*(K-1)/2  =>  T_out == T

    fused = (K * dim_i) <= 512          # deep im2col contraction vs per-tap loop
    mm_bytes = jnp.dtype(matmul_dtype).itemsize
    in_bytes = jnp.dtype(features.dtype).itemsize
    lane_i = _round_up(dim_i, 128)
    lane_o = _round_up(dim_o, 128)
    lane_ki = _round_up(K * dim_i, 128)

    # ---- VMEM-budget driven time tile (per-generation via get_tpu_info) ----
    row_bytes = (2 * in_bytes * lane_i              # input tile, double buffered
                 + 2 * in_bytes * lane_o            # output tile, double buffered
                 + mm_bytes * lane_i                # window scratch
                 + (mm_bytes * lane_ki if fused else 0)   # im2col scratch
                 + 8 * lane_o)                      # acc / y live values
    fixed_bytes = (mm_bytes * _round_up(K * dim_i, 8) * lane_o   # weights (1 buf)
                   + 2 * in_bytes * _round_up(2 * pad, 8) * lane_i   # halos
                   + mm_bytes * (_round_up(pad, 8) + pad) * lane_i   # window halo rows
                   + 32 * lane_o)                                     # params
    budget = int(0.55 * _VMEM_BYTES)
    avail = max(budget - fixed_bytes, 128 * row_bytes)
    if time_tile is None:
        target = max(128, min(1024, avail // max(row_bytes, 1)))
    else:
        target = time_tile
    tT = _pick_time_tile(T, target)
    # v7x has 2 TensorCores per chip: make sure the parallel grid has >= 2 blocks.
    if B * ((T + tT - 1) // tT) < 2 and T > 8:
        tT = max(8, _round_up((T + 1) // 2, 8))

    T_pad = _round_up(T, tT)
    n_t = T_pad // tT
    win_off = _round_up(pad, 8)

    # ---- main input: only pad the time tail (zeros match conv zero-padding) ----
    feat_p = features if T_pad == T else jnp.pad(
        features, ((0, 0), (0, T_pad - T), (0, 0)))

    # ---- tiny per-tile halos, merged into one (B, n_t, 2*pad, dim_i) input;
    #      rows outside [0, T) are the conv's zero padding ----
    j0 = np.arange(n_t)[:, None] * tT
    rows = np.concatenate([j0 - pad + np.arange(pad)[None, :],
                           j0 + tT + np.arange(pad)[None, :]], axis=1)
    valid = (rows >= 0) & (rows < T)
    rows_c = np.clip(rows, 0, T - 1)
    halos = jnp.take(features, jnp.asarray(rows_c.reshape(-1)), axis=1)
    halos = halos.reshape(B, n_t, 2 * pad, dim_i)
    halos = jnp.where(jnp.asarray(valid)[None, :, :, None], halos, 0)
    halos = halos.astype(features.dtype)

    # ---- weights: (dim_o, dim_i, K) -> (K, dim_i, dim_o), matmul dtype ----
    w_kio = jnp.transpose(conv_w, (2, 1, 0)).astype(matmul_dtype)
    if fused:
        w_in = w_kio.reshape(K * dim_i, dim_o)
        w_spec = pl.BlockSpec((K * dim_i, dim_o), lambda b, j: (0, 0),
                              pipeline_mode=pl.Buffered(1))
    else:
        w_in = w_kio
        w_spec = pl.BlockSpec((K, dim_i, dim_o), lambda b, j: (0, 0, 0),
                              pipeline_mode=pl.Buffered(1))

    # ---- conv bias / LN gamma / LN beta merged into one (3, dim_o) operand ----
    params = jnp.stack([conv_b, ln_gamma, ln_beta]).astype(jnp.float32)
    p_spec = pl.BlockSpec((3, dim_o), lambda b, j: (0, 0),
                          pipeline_mode=pl.Buffered(1))

    scratch = [pltpu.VMEM((win_off + tT + pad, dim_i), matmul_dtype)]
    if fused:
        scratch.append(pltpu.VMEM((tT, K * dim_i), matmul_dtype))

    kernel = functools.partial(
        _tdnn_kernel, k_taps=K, dilation=dilation, pad=pad, win_off=win_off,
        mm_dtype=matmul_dtype, fused=fused)

    vmem_limit = int(max(32 * 2 ** 20, min(0.70 * _VMEM_BYTES, 96 * 2 ** 20)))

    out_p = pl.pallas_call(
        kernel,
        out_shape=jax.ShapeDtypeStruct((B, T_pad, dim_o), features.dtype),
        grid_spec=pltpu.PrefetchScalarGridSpec(
            num_scalar_prefetch=0,
            grid=(B, n_t),
            in_specs=[
                pl.BlockSpec((pl.Squeezed(), tT, dim_i),
                             lambda b, j: (b, j, 0)),
                pl.BlockSpec((pl.Squeezed(), pl.Squeezed(), 2 * pad, dim_i),
                             lambda b, j: (b, j, 0, 0)),
                w_spec,
                p_spec,
            ],
            out_specs=pl.BlockSpec((pl.Squeezed(), tT, dim_o),
                                   lambda b, j: (b, j, 0)),
            scratch_shapes=scratch,
        ),
        compiler_params=pltpu.CompilerParams(
            dimension_semantics=("parallel", "parallel"),
            vmem_limit_bytes=vmem_limit,
        ),
    )(feat_p, halos, w_in, params)

    out = out_p if T_pad == T else out_p[:, :T, :]
    new_lens = lens * (T_out / T)
    return out, new_lens


# ----------------------------- reference & test ------------------------------

def _reference(features, conv_w, conv_b, ln_gamma, ln_beta,
               half_context, dilation, matmul_dtype):
    """Pure-JAX reference using the same matmul precision as the kernel."""
    lhs = jnp.transpose(features, (0, 2, 1)).astype(matmul_dtype)   # NCW
    rhs = conv_w.astype(matmul_dtype)                               # OIW
    conv = jax.lax.conv_general_dilated(
        lhs, rhs, window_strides=(1,),
        padding=[(half_context * dilation,) * 2],
        rhs_dilation=(dilation,),
        dimension_numbers=("NCW", "OIW", "NCW"),
        preferred_element_type=jnp.float32,
    ) + conv_b[None, :, None]
    y = jnp.maximum(conv, 0.0)
    y = jnp.transpose(y, (0, 2, 1))
    mu = jnp.mean(y, axis=-1, keepdims=True)
    va = jnp.mean((y - mu) ** 2, axis=-1, keepdims=True)
    return (y - mu) * jax.lax.rsqrt(va + LN_EPS) * ln_gamma + ln_beta


def _run_and_check(key, *, B, T, dim_i, dim_o, half_context, dilation,
                   time_tile, matmul_dtype):
    K = 2 * half_context + 1
    k1, k2, k3, k4, k5 = jax.random.split(key, 5)
    features = jax.random.normal(k1, (B, T, dim_i), dtype=jnp.float32)
    lens = jnp.linspace(T * 0.5, float(T), B).astype(jnp.float32)
    conv_w = 0.1 * jax.random.normal(k2, (dim_o, dim_i, K), dtype=jnp.float32)
    conv_b = 0.1 * jax.random.normal(k3, (dim_o,), dtype=jnp.float32)
    ln_gamma = 1.0 + 0.1 * jax.random.normal(k4, (dim_o,), dtype=jnp.float32)
    ln_beta = 0.1 * jax.random.normal(k5, (dim_o,), dtype=jnp.float32)
    # arch_weight of Edge is unused in forward; dropout=None -> no-op.

    out, new_lens = tdnn_forward(
        features, lens, conv_w, conv_b, ln_gamma, ln_beta,
        half_context=half_context, dilation=dilation,
        time_tile=time_tile, matmul_dtype=matmul_dtype)
    jax.block_until_ready((out, new_lens))

    ref = _reference(features, conv_w, conv_b, ln_gamma, ln_beta,
                     half_context, dilation, matmul_dtype)

    assert out.shape == (B, T, dim_o), f"bad shape {out.shape}"
    err = float(jnp.max(jnp.abs(out - ref)))
    assert jnp.allclose(out, ref, atol=3e-3, rtol=3e-3), f"mismatch, max err={err}"
    assert jnp.allclose(new_lens, lens), "lens scaling mismatch"


if __name__ == "__main__":
    key = jax.random.PRNGKey(0)
    ka, kb, kc, kd = jax.random.split(key, 4)

    # 1) module-default config (half_context=1, dilation=1), auto tile,
    #    fused im2col path, bf16 MXU operands, dim_o stored directly (16 lanes).
    _run_and_check(ka, B=2, T=16, dim_i=8, dim_o=16,
                   half_context=1, dilation=1, time_tile=None,
                   matmul_dtype=jnp.bfloat16)

    # 2) multi-tile time grid with halos, dilation > 1, and T not divisible by
    #    the tile (tail padding path), fused im2col.
    _run_and_check(kb, B=2, T=60, dim_i=8, dim_o=16,
                   half_context=2, dilation=2, time_tile=16,
                   matmul_dtype=jnp.bfloat16)

    # 3) dim_i = 128 -> lane-aligned im2col tap slots, multi-tile.
    _run_and_check(kc, B=2, T=32, dim_i=128, dim_o=64,
                   half_context=1, dilation=1, time_tile=16,
                   matmul_dtype=jnp.bfloat16)

    # 4) wide dim_i (K*dim_i > 512) -> per-tap K-loop path, bf16 matmul.
    _run_and_check(kd, B=2, T=32, dim_i=256, dim_o=128,
                   half_context=1, dilation=1, time_tile=None,
                   matmul_dtype=jnp.bfloat16)

    # TODO(synk): norm='bn' (MaskedBatchNorm1d) variant and training-mode dropout
    # are not implemented; only the default LayerNorm / eval path is covered.
    print("KERNEL_OK")
</pallas_src>

<mosaic_0001>
module attributes {stable_mosaic.version = 11 : i64} {
  func.func @_tdnn_kernel(%arg0: i32, %arg1: i32, %arg2: memref<1x16x8xf32, #tpu.memory_space<vmem>>, %arg3: memref<1x1x2x8xf32, #tpu.memory_space<vmem>>, %arg4: memref<24x16xbf16, #tpu.memory_space<vmem>>, %arg5: memref<3x16xf32, #tpu.memory_space<vmem>>, %arg6: memref<1x16x16xf32, #tpu.memory_space<vmem>>, %arg7: memref<25x8xbf16, #tpu.memory_space<vmem>>, %arg8: memref<16x24xbf16, #tpu.memory_space<vmem>>) attributes {dimension_semantics = [#tpu.dimension_semantics<parallel>, #tpu.dimension_semantics<parallel>], iteration_bounds = array<i64: 2, 1>, scalar_prefetch = 0 : i64, scratch_operands = 2 : i64, tpu.core_type = #tpu.core_type<tc>, window_params = [{transform_indices = @transform_0, window_bounds = array<i64: 1, 16, 8>}, {transform_indices = @transform_1, window_bounds = array<i64: 1, 1, 2, 8>}, {pipeline_mode = #tpu.pipeline_mode<synchronous>, transform_indices = @transform_2, window_bounds = array<i64: 24, 16>}, {pipeline_mode = #tpu.pipeline_mode<synchronous>, transform_indices = @transform_3, window_bounds = array<i64: 3, 16>}, {transform_indices = @transform_4, window_bounds = array<i64: 1, 16, 16>}]} {
    %c0 = arith.constant 0 : index
    %c0_0 = arith.constant 0 : index
    %c0_1 = arith.constant 0 : index
    %c0_2 = arith.constant 0 : index
    %0 = vector.load %arg3[%c0, %c0_0, %c0_1, %c0_2] : memref<1x1x2x8xf32, #tpu.memory_space<vmem>>, vector<1x1x1x8xf32>
    %1 = vector.shape_cast %0 : vector<1x1x1x8xf32> to vector<1x8xf32>
    %2 = arith.truncf %1 : vector<1x8xf32> to vector<1x8xbf16>
    %c7 = arith.constant 7 : index
    %c0_3 = arith.constant 0 : index
    %3 = vector.load %arg7[%c7, %c0_3] : memref<25x8xbf16, #tpu.memory_space<vmem>>, vector<1x8xbf16>
    tpu.vector_store %arg7[%c7, %c0_3], %2 {strides = array<i32>} : memref<25x8xbf16, #tpu.memory_space<vmem>>, vector<1x8xbf16>,
    %c0_4 = arith.constant 0 : index
    %c0_5 = arith.constant 0 : index
    %c0_6 = arith.constant 0 : index
    %4 = vector.load %arg2[%c0_4, %c0_5, %c0_6] : memref<1x16x8xf32, #tpu.memory_space<vmem>>, vector<1x16x8xf32>
    %5 = vector.shape_cast %4 : vector<1x16x8xf32> to vector<16x8xf32>
    %6 = arith.truncf %5 : vector<16x8xf32> to vector<16x8xbf16>
    %c8 = arith.constant 8 : index
    %c0_7 = arith.constant 0 : index
    %7 = vector.load %arg7[%c8, %c0_7] : memref<25x8xbf16, #tpu.memory_space<vmem>>, vector<16x8xbf16>
    tpu.vector_store %arg7[%c8, %c0_7], %6 {strides = array<i32>} : memref<25x8xbf16, #tpu.memory_space<vmem>>, vector<16x8xbf16>,
    %c0_8 = arith.constant 0 : index
    %c0_9 = arith.constant 0 : index
    %c1 = arith.constant 1 : index
    %c0_10 = arith.constant 0 : index
    %8 = vector.load %arg3[%c0_8, %c0_9, %c1, %c0_10] : memref<1x1x2x8xf32, #tpu.memory_space<vmem>>, vector<1x1x1x8xf32>
    %9 = vector.shape_cast %8 : vector<1x1x1x8xf32> to vector<1x8xf32>
    %10 = arith.truncf %9 : vector<1x8xf32> to vector<1x8xbf16>
    %c24 = arith.constant 24 : index
    %c0_11 = arith.constant 0 : index
    %11 = vector.load %arg7[%c24, %c0_11] : memref<25x8xbf16, #tpu.memory_space<vmem>>, vector<1x8xbf16>
    tpu.vector_store %arg7[%c24, %c0_11], %10 {strides = array<i32>} : memref<25x8xbf16, #tpu.memory_space<vmem>>, vector<1x8xbf16>,
    %c7_12 = arith.constant 7 : index
    %c0_13 = arith.constant 0 : index
    %12 = vector.load %arg7[%c7_12, %c0_13] : memref<25x8xbf16, #tpu.memory_space<vmem>>, vector<16x8xbf16>
    %c0_14 = arith.constant 0 : index
    %c0_15 = arith.constant 0 : index
    %13 = vector.load %arg8[%c0_14, %c0_15] : memref<16x24xbf16, #tpu.memory_space<vmem>>, vector<16x8xbf16>
    tpu.vector_store %arg8[%c0_14, %c0_15], %12 {strides = array<i32>} : memref<16x24xbf16, #tpu.memory_space<vmem>>, vector<16x8xbf16>,
    %c8_16 = arith.constant 8 : index
    %c0_17 = arith.constant 0 : index
    %14 = vector.load %arg7[%c8_16, %c0_17] : memref<25x8xbf16, #tpu.memory_space<vmem>>, vector<16x8xbf16>
    %c0_18 = arith.constant 0 : index
    %c8_19 = arith.constant 8 : index
    %15 = vector.load %arg8[%c0_18, %c8_19] : memref<16x24xbf16, #tpu.memory_space<vmem>>, vector<16x8xbf16>
    tpu.vector_store %arg8[%c0_18, %c8_19], %14 {strides = array<i32>} : memref<16x24xbf16, #tpu.memory_space<vmem>>, vector<16x8xbf16>,
    %c9 = arith.constant 9 : index
    %c0_20 = arith.constant 0 : index
    %16 = vector.load %arg7[%c9, %c0_20] : memref<25x8xbf16, #tpu.memory_space<vmem>>, vector<16x8xbf16>
    %c0_21 = arith.constant 0 : index
    %c16 = arith.constant 16 : index
    %17 = vector.load %arg8[%c0_21, %c16] : memref<16x24xbf16, #tpu.memory_space<vmem>>, vector<16x8xbf16>
    tpu.vector_store %arg8[%c0_21, %c16], %16 {strides = array<i32>} : memref<16x24xbf16, #tpu.memory_space<vmem>>, vector<16x8xbf16>,
    %c0_22 = arith.constant 0 : index
    %c0_23 = arith.constant 0 : index
    %18 = vector.load %arg8[%c0_22, %c0_23] : memref<16x24xbf16, #tpu.memory_space<vmem>>, vector<16x24xbf16>
    %c0_24 = arith.constant 0 : index
    %c0_25 = arith.constant 0 : index
    %19 = vector.load %arg4[%c0_24, %c0_25] : memref<24x16xbf16, #tpu.memory_space<vmem>>, vector<24x16xbf16>
    %cst = arith.constant dense<0.000000e+00> : vector<16x16xf32>
    %20 = tpu.matmul %18, %19, %cst {dimension_numbers = #tpu.dot_dimension_numbers<[1], [0], [0], [1], [0, 0, 1, 1], [], []>} : vector<16x24xbf16>, vector<24x16xbf16>, vector<16x16xf32> -> vector<16x16xf32>
    %c0_26 = arith.constant 0 : index
    %c0_27 = arith.constant 0 : index
    %21 = vector.load %arg5[%c0_26, %c0_27] : memref<3x16xf32, #tpu.memory_space<vmem>>, vector<3x16xf32>
    %22 = vector.extract_strided_slice %21 {offsets = [0, 0], sizes = [1, 16], strides = [1, 1]} : vector<3x16xf32> to vector<1x16xf32>
    %23 = vector.broadcast %22 : vector<1x16xf32> to vector<16x16xf32>
    %24 = arith.addf %20, %23 : vector<16x16xf32>
    %cst_28 = arith.constant 0.000000e+00 : f32
    %25 = vector.broadcast %cst_28 : f32 to vector<16x16xf32>
    %26 = arith.maximumf %24, %25 : vector<16x16xf32>
    %cst_29 = arith.constant dense<0.000000e+00> : vector<16xf32>
    %27 = vector.multi_reduction <add>, %26, %cst_29 [1] : vector<16x16xf32> to vector<16xf32>
    %28 = vector.shape_cast %27 : vector<16xf32> to vector<16x1xf32>
    %cst_30 = arith.constant 1.600000e+01 : f32
    %29 = vector.broadcast %cst_30 : f32 to vector<16x1xf32>
    %30 = arith.divf %28, %29 : vector<16x1xf32>
    %31 = vector.broadcast %30 : vector<16x1xf32> to vector<16x16xf32>
    %32 = arith.subf %26, %31 : vector<16x16xf32>
    %33 = arith.mulf %32, %32 : vector<16x16xf32>
    %cst_31 = arith.constant dense<0.000000e+00> : vector<16xf32>
    %34 = vector.multi_reduction <add>, %33, %cst_31 [1] : vector<16x16xf32> to vector<16xf32>
    %35 = vector.shape_cast %34 : vector<16xf32> to vector<16x1xf32>
    %cst_32 = arith.constant 1.600000e+01 : f32
    %36 = vector.broadcast %cst_32 : f32 to vector<16x1xf32>
    %37 = arith.divf %35, %36 : vector<16x1xf32>
    %cst_33 = arith.constant 9.99999974E-6 : f32
    %38 = vector.broadcast %cst_33 : f32 to vector<16x1xf32>
    %39 = arith.addf %37, %38 : vector<16x1xf32>
    %40 = math.rsqrt %39 : vector<16x1xf32>
    %41 = vector.broadcast %40 : vector<16x1xf32> to vector<16x16xf32>
    %42 = arith.mulf %32, %41 : vector<16x16xf32>
    %43 = vector.extract_strided_slice %21 {offsets = [1, 0], sizes = [1, 16], strides = [1, 1]} : vector<3x16xf32> to vector<1x16xf32>
    %44 = vector.broadcast %43 : vector<1x16xf32> to vector<16x16xf32>
    %45 = arith.mulf %42, %44 : vector<16x16xf32>
    %46 = vector.extract_strided_slice %21 {offsets = [2, 0], sizes = [1, 16], strides = [1, 1]} : vector<3x16xf32> to vector<1x16xf32>
    %47 = vector.broadcast %46 : vector<1x16xf32> to vector<16x16xf32>
    %48 = arith.addf %45, %47 : vector<16x16xf32>
    %c0_34 = arith.constant 0 : index
    %c0_35 = arith.constant 0 : index
    %c0_36 = arith.constant 0 : index
    %49 = vector.load %arg6[%c0_34, %c0_35, %c0_36] : memref<1x16x16xf32, #tpu.memory_space<vmem>>, vector<1x16x16xf32>
    %50 = vector.shape_cast %49 : vector<1x16x16xf32> to vector<16x16xf32>
    %51 = vector.shape_cast %48 : vector<16x16xf32> to vector<1x16x16xf32>
    tpu.vector_store %arg6[%c0_34, %c0_35, %c0_36], %51 {strides = array<i32>} : memref<1x16x16xf32, #tpu.memory_space<vmem>>, vector<1x16x16xf32>,
    return
  }
  func.func @transform_0(%arg0: i32, %arg1: i32) -> (i32, i32, i32) {
    %c0_i32 = arith.constant 0 : i32
    %c0_i32_0 = arith.constant 0 : i32
    return %arg0, %arg1, %c0_i32 : i32, i32, i32
  }
  func.func @transform_1(%arg0: i32, %arg1: i32) -> (i32, i32, i32, i32) {
    %c0_i32 = arith.constant 0 : i32
    %c0_i32_0 = arith.constant 0 : i32
    %c0_i32_1 = arith.constant 0 : i32
    return %arg0, %arg1, %c0_i32, %c0_i32_0 : i32, i32, i32, i32
  }
  func.func @transform_2(%arg0: i32, %arg1: i32) -> (i32, i32) {
    %c0_i32 = arith.constant 0 : i32
    %c0_i32_0 = arith.constant 0 : i32
    %c0_i32_1 = arith.constant 0 : i32
    return %c0_i32, %c0_i32_0 : i32, i32
  }
  func.func @transform_3(%arg0: i32, %arg1: i32) -> (i32, i32) {
    %c0_i32 = arith.constant 0 : i32
    %c0_i32_0 = arith.constant 0 : i32
    %c0_i32_1 = arith.constant 0 : i32
    return %c0_i32, %c0_i32_0 : i32, i32
  }
  func.func @transform_4(%arg0: i32, %arg1: i32) -> (i32, i32, i32) {
    %c0_i32 = arith.constant 0 : i32
    %c0_i32_0 = arith.constant 0 : i32
    return %arg0, %arg1, %c0_i32 : i32, i32, i32
  }
}

</mosaic_0001>

<llo_original>
// kernel: tdnn_forward.1
$region0: #{tdnn_forward.1}
  #allocation0 [shape = 'u32[]', space=smem, size = 0x4, offset = 0x4, fixed_abs, tag = 'smem constant byte address 0x4 - core index']
  #allocation1 [shape = 'u32[144,128]{1,0:T(1,128)}', space=vmem, size = 0x12000, scoped, tag = 'internal scratch']
  #allocation2 [shape = 'bf16[25,8]{1,0:T(8,128)(2,1)}', space=vmem, size = 0x2000, scoped, tag = 'scratch operand']
  #allocation3 [shape = 'bf16[16,24]{1,0:T(8,128)(2,1)}', space=vmem, size = 0x1000, scoped, tag = 'scratch operand']
  %s0 = inlined_call_operand.vmem [shape: f32[2,16,8], index: 0, kind: input, shape index: {}]
  %s1 = inlined_call_operand.vmem [shape: f32[2,1,2,8], index: 1, kind: input, shape index: {}]
  %s2 = inlined_call_operand.vmem [shape: bf16[24,16], index: 2, kind: input, shape index: {}]
  %s3 = inlined_call_operand.vmem [shape: f32[3,16], index: 3, kind: input, shape index: {}]
  %s4 = inlined_call_operand.hbm [shape: f32[2,16,16], index: 4, kind: output, shape index: {}]
  %s5 = sld [smem:[#allocation0]]
  $region49: #{tdnn_forward.1} parent=0
    _
  %s7 = ssub.s32 1, %s5
  %s8 = scalar_select 0, %s7, %s5
  $region1: #{tdnn_forward.1} parent=0
    #allocation4 [shape = 'u8[16384]{0}', space=vmem, size = 0x4000, scoped, tag = 'output window, operand 0']
    #allocation5 [shape = 's32[2]{0}', space=sflag, size = 0x8, scoped, tag = 'scoped memory for tdnn_forward.1']
    %9 = vsyncpa [#allocation5], 0
    %s10 = scalar_lea.sflag [#allocation5], 1
    %11 = vsyncpa %s10, 0
    loop: start=0, step=1, limit=4
    $region2: #{tdnn_forward.1} parent=1 // loop_pre_header
      _
    $region3: #{tdnn_forward.1} parent=1 // loop_header
      %s13 = sphi 0, %s17
      %p14 = scmp.ge.s32.totalorder %s13, 4
      %s20 = sphi 0, %s32
      %s21 = sphi 0, %s28
      %s22 = sphi 0, %s20
      %s23 = sphi 0, %s21
      %s24 = sphi 0, %s22
      %s25 = sphi 0, %s23
      %s37 = sphi 0, %s39
      %s40 = sphi 0, %s37
      %s41 = sphi 0, %s40
      %s57 = sphi 0, %s41
      %s65 = sphi 0, %s67
      %s68 = sphi 0, %s65
      %s69 = sphi 0, %s68
      %s85 = sphi 0, %s69
      %s89 = sphi 0, %s89
      %s91 = sphi 0, %s89
      %s92 = sphi 0, %s91
      %s106 = sphi 0, %s92
      %s110 = sphi 0, %s110
      %s112 = sphi 0, %s110
      %s113 = sphi 0, %s112
      %s127 = sphi 0, %s113
      %s135 = sphi 0, %s137
      %s138 = sphi 0, %s135
      %s139 = sphi 0, %s138
      %s155 = sphi 0, %s139
    $region4: #{tdnn_forward.1} parent=1 // loop_header_branch
      %16 = sbr.rel (%p14) target = $region8
    $region5: #{tdnn_forward.1} parent=1 // loop_body
      %s18 = ssub.s32 %s13, 1
      %s19 = ssub.s32 %s13, 2
      %s26 = sadd.s32 1, %s21
      %p27 = scmp.ge.s32.totalorder %s26, 1
      %s28 = scalar_select %p27, 0, %s26
      %s29 = sadd.s32 1, %s20
      %s30 = scalar_select %p27, %s29, %s20
      %p31 = scmp.ge.s32.totalorder %s30, 2
      %s32 = scalar_select %p31, 0, %s30
      %s33 = ssub.s32 %s20, %s32
      %s34 = ssub.s32 %s21, %s28
      %s35 = sor.u32 %s33, %s34
      %p36 = scmp.eq.s32.totalorder %s35, 0
      %s38 = sadd.s32 %s37, 1
      %s39 = scalar_select %p36, %s37, %s38
      %p42 = pneg %p36
      %p43 = scmp.eq.s32.totalorder %s13, 1
      %p44 = por %p42, %p43
      %p45 = scmp.ne.s32.totalorder %s37, %s40
      %p46 = scmp.eq.s32.totalorder %s13, 0
      %p47 = por %p45, %p46
      %p48 = scmp.ne.s32.totalorder %s37, %s40
      %p49 = scmp.eq.s32.totalorder %s18, 1
      %p50 = por %p48, %p49
      %p51 = scmp.ne.s32.totalorder %s40, %s41
      %p52 = scmp.eq.s32.totalorder %s18, 0
      %p53 = por %p51, %p52
      %p54 = scmp.ne.s32.totalorder %s40, %s41
      %p55 = scmp.eq.s32.totalorder %s19, 1
      %p56 = por %p54, %p55
      %p58 = scmp.ne.s32.totalorder %s41, %s57
      %p59 = scmp.eq.s32.totalorder %s19, 0
      %p60 = por %p58, %p59
      %s61 = ssub.s32 %s20, %s32
      %s62 = ssub.s32 %s21, %s28
      %s63 = sor.u32 %s61, %s62
      %p64 = scmp.eq.s32.totalorder %s63, 0
      %s66 = sadd.s32 %s65, 1
      %s67 = scalar_select %p64, %s65, %s66
      %p70 = pneg %p64
      %p71 = scmp.eq.s32.totalorder %s13, 1
      %p72 = por %p70, %p71
      %p73 = scmp.ne.s32.totalorder %s65, %s68
      %p74 = scmp.eq.s32.totalorder %s13, 0
      %p75 = por %p73, %p74
      %p76 = scmp.ne.s32.totalorder %s65, %s68
      %p77 = scmp.eq.s32.totalorder %s18, 1
      %p78 = por %p76, %p77
      %p79 = scmp.ne.s32.totalorder %s68, %s69
      %p80 = scmp.eq.s32.totalorder %s18, 0
      %p81 = por %p79, %p80
      %p82 = scmp.ne.s32.totalorder %s68, %s69
      %p83 = scmp.eq.s32.totalorder %s19, 1
      %p84 = por %p82, %p83
      %p86 = scmp.ne.s32.totalorder %s69, %s85
      %p87 = scmp.eq.s32.totalorder %s19, 0
      %p88 = por %p86, %p87
      %s90 = sadd.s32 %s89, 1
      %p93 = scmp.eq.s32.totalorder %s13, 1
      %p94 = scmp.ne.s32.totalorder %s89, %s91
      %p95 = scmp.eq.s32.totalorder %s13, 0
      %p96 = por %p94, %p95
      %p97 = scmp.ne.s32.totalorder %s89, %s91
      %p98 = scmp.eq.s32.totalorder %s18, 1
      %p99 = por %p97, %p98
      %p100 = scmp.ne.s32.totalorder %s91, %s92
      %p101 = scmp.eq.s32.totalorder %s18, 0
      %p102 = por %p100, %p101
      %p103 = scmp.ne.s32.totalorder %s91, %s92
      %p104 = scmp.eq.s32.totalorder %s19, 1
      %p105 = por %p103, %p104
      %p107 = scmp.ne.s32.totalorder %s92, %s106
      %p108 = scmp.eq.s32.totalorder %s19, 0
      %p109 = por %p107, %p108
      %s111 = sadd.s32 %s110, 1
      %p114 = scmp.eq.s32.totalorder %s13, 1
      %p115 = scmp.ne.s32.totalorder %s110, %s112
      %p116 = scmp.eq.s32.totalorder %s13, 0
      %p117 = por %p115, %p116
      %p118 = scmp.ne.s32.totalorder %s110, %s112
      %p119 = scmp.eq.s32.totalorder %s18, 1
      %p120 = por %p118, %p119
      %p121 = scmp.ne.s32.totalorder %s112, %s113
      %p122 = scmp.eq.s32.totalorder %s18, 0
      %p123 = por %p121, %p122
      %p124 = scmp.ne.s32.totalorder %s112, %s113
      %p125 = scmp.eq.s32.totalorder %s19, 1
      %p126 = por %p124, %p125
      %p128 = scmp.ne.s32.totalorder %s113, %s127
      %p129 = scmp.eq.s32.totalorder %s19, 0
      %p130 = por %p128, %p129
      %s131 = ssub.s32 %s20, %s32
      %s132 = ssub.s32 %s21, %s28
      %s133 = sor.u32 %s131, %s132
      %p134 = scmp.eq.s32.totalorder %s133, 0
      %s136 = sadd.s32 %s135, 1
      %s137 = scalar_select %p134, %s135, %s136
      %p140 = pneg %p134
      %p141 = scmp.eq.s32.totalorder %s13, 1
      %p142 = por %p140, %p141
      %p143 = scmp.ne.s32.totalorder %s135, %s138
      %p144 = scmp.eq.s32.totalorder %s13, 0
      %p145 = por %p143, %p144
      %p146 = scmp.ne.s32.totalorder %s135, %s138
      %p147 = scmp.eq.s32.totalorder %s18, 1
      %p148 = por %p146, %p147
      %p149 = scmp.ne.s32.totalorder %s138, %s139
      %p150 = scmp.eq.s32.totalorder %s18, 0
      %p151 = por %p149, %p150
      %p152 = scmp.ne.s32.totalorder %s138, %s139
      %p153 = scmp.eq.s32.totalorder %s19, 1
      %p154 = por %p152, %p153
      %p156 = scmp.ne.s32.totalorder %s139, %s155
      %p157 = scmp.eq.s32.totalorder %s19, 0
      %p158 = por %p156, %p157
      %p159 = scmp.le.s32.totalorder 1, %s13
      %p160 = scmp.lt.s32.totalorder %s13, 3
      %p161 = pnand %p159, %p160
      %p162 = pneg %p161
      // Predicated region
      $region9: #{tdnn_forward.1} parent=5 // pred_check
        _
      $region10: #{tdnn_forward.1} parent=5 // pred_check_branch
        %164 = sbr.rel (%p161) target = $region12
      $region11: #{tdnn_forward.1} parent=5 // pred_region
        %s165 = ssub.s32 %s13, 1
        // Predicated region
        $region13: #{tdnn_forward.1} parent=11 // pred_check
          %p166 = pneg %p102
        $region14: #{tdnn_forward.1} parent=11 // pred_check_branch
          %168 = sbr.rel (%p166) target = $region16
        $region15: #{tdnn_forward.1} parent=11 // pred_region
          _
        $region16: #{tdnn_forward.1} parent=11 // pred_fallthru
          _
        // Predicated region
        $region17: #{tdnn_forward.1} parent=11 // pred_check
          %p169 = pneg %p123
        $region18: #{tdnn_forward.1} parent=11 // pred_check_branch
          %171 = sbr.rel (%p169) target = $region20
        $region19: #{tdnn_forward.1} parent=11 // pred_region
          _
        $region20: #{tdnn_forward.1} parent=11 // pred_fallthru
          _
      $region12: #{tdnn_forward.1} parent=5 // pred_fallthru
        _
      %p172 = scmp.lt.s32.totalorder %s13, 2
      // Predicated region
      $region21: #{tdnn_forward.1} parent=5 // pred_check
        %p173 = pneg %p172
      $region22: #{tdnn_forward.1} parent=5 // pred_check_branch
        %175 = sbr.rel (%p173) target = $region24
      $region23: #{tdnn_forward.1} parent=5 // pred_region
        // Predicated region
        $region25: #{tdnn_forward.1} parent=23 // pred_check
          %p176 = pneg %p47
        $region26: #{tdnn_forward.1} parent=23 // pred_check_branch
          %178 = sbr.rel (%p176) target = $region28
        $region27: #{tdnn_forward.1} parent=23 // pred_region
          %s179 = smul.u32 2, %s21
          %p180 = scmp.lt.s32.totalorder %s20, 1
          %s181 = scalar_select %p180, %s20, 1
          %p182 = scmp.lt.s32.totalorder %s179, 1
          %s183 = scalar_select %p182, %s179, 1
          %s184 = smul.addr %s181, 2
          %s185 = sadd.s32 %s183, %s184
          %s186 = smul.addr %s185, 8
          %s187 = scalar_lea.vmem %s0, %s186
          %s188 = smul.u32 2, %s21
        $region28: #{tdnn_forward.1} parent=23 // pred_fallthru
          _
        // Predicated region
        $region29: #{tdnn_forward.1} parent=23 // pred_check
          %p189 = pneg %p75
        $region30: #{tdnn_forward.1} parent=23 // pred_check_branch
          %191 = sbr.rel (%p189) target = $region32
        $region31: #{tdnn_forward.1} parent=23 // pred_region
          %p192 = scmp.lt.s32.totalorder %s20, 1
          %s193 = scalar_select %p192, %s20, 1
          %p194 = scmp.lt.s32.totalorder %s21, 0
          %s195 = scalar_select %p194, %s21, 0
          %s196 = sadd.s32 %s195, %s193
          %s197 = smul.addr %s196, 2
          %s198 = scalar_lea.vmem %s1, %s197
        $region32: #{tdnn_forward.1} parent=23 // pred_fallthru
          _
      $region24: #{tdnn_forward.1} parent=5 // pred_fallthru
        _
      %p199 = scmp.le.s32.totalorder 1, %s13
      %p200 = scmp.lt.s32.totalorder %s13, 3
      %p201 = pnand %p199, %p200
      %p202 = pneg %p201
      // Predicated region
      $region33: #{tdnn_forward.1} parent=5 // pred_check
        _
      $region34: #{tdnn_forward.1} parent=5 // pred_check_branch
        %204 = sbr.rel (%p201) target = $region36
      $region35: #{tdnn_forward.1} parent=5 // pred_region
        %s205 = ssub.s32 %s13, 1
        %s206 = smul.u32 2, %s23
        %p207 = scmp.lt.s32.totalorder %s22, 1
        %s208 = scalar_select %p207, %s22, 1
        %p209 = scmp.lt.s32.totalorder %s206, 1
        %s210 = scalar_select %p209, %s206, 1
        %s211 = smul.addr %s208, 2
        %s212 = sadd.s32 %s210, %s211
        %s213 = smul.addr %s212, 8
        %s214 = scalar_lea.vmem %s0, %s213
        %p215 = pneg %p53
        %p216 = pneg %p50
        %p217 = scmp.lt.s32.totalorder %s22, 1
        %s218 = scalar_select %p217, %s22, 1
        %p219 = scmp.lt.s32.totalorder %s23, 0
        %s220 = scalar_select %p219, %s23, 0
        %s221 = sadd.s32 %s220, %s218
        %s222 = smul.addr %s221, 2
        %s223 = scalar_lea.vmem %s1, %s222
        %p224 = pneg %p81
        %p225 = pneg %p78
        %p226 = pneg %p102
        %p227 = pneg %p99
        %p228 = pneg %p123
        %p229 = pneg %p120
        %p230 = pneg %p151
        %p231 = pneg %p148
        %s232 = sand.u32 %s138, 1
        %s233 = scalar_lea.sflag [#allocation5], %s232
        %s234 = sand.u32 %s138, 1
        %s235 = smul.addr %s234, 16
        %s236 = scalar_lea.vmem [#allocation4], %s235
        %s237 = smul.u32 2, %s23
        %p238 = scmp.lt.s32.totalorder %s22, 1
        %s239 = scalar_select %p238, %s22, 1
        %p240 = scmp.lt.s32.totalorder %s237, 1
        %s241 = scalar_select %p240, %s237, 1
        %s242 = smul.addr %s239, 2
        %s243 = sadd.s32 %s241, %s242
        %s244 = smul.addr %s243, 8
        %s245 = scalar_lea.vmem %s0, %s244
        %s246 = smul.u32 2, %s23
        %p247 = scmp.lt.s32.totalorder %s22, 1
        %s248 = scalar_select %p247, %s22, 1
        %p249 = scmp.lt.s32.totalorder %s23, 0
        %s250 = scalar_select %p249, %s23, 0
        %s251 = sadd.s32 %s250, %s248
        %s252 = smul.addr %s251, 2
        %s253 = scalar_lea.vmem %s1, %s252
        %s254 = smul.u32 2, %s23
        %v256 = vld [vmem:[%s253] sm:$0x1]
        %v257 = vpack.c.bf16 %v256, %v256
        %v259 = vunpack.c.l.b16 %v257
        %v260 = vpack.c.b16 %v259, %v259
        %v262 = vshll.u32 %v260, 16
        %v264 = vrot.slane %v262, 5
        %vm266 = vcmask 60419
        %vm267 = vsmask.f32 7950
        %vm268 = vmand %vm266, %vm267
        %v269 = vld [vmem:[#allocation2] sm:$0x8]
        %v270 = vsel %vm268, %v264, %v269
        %271 = vst [vmem:[#allocation2] sm:$0x8] %v270
        %v272 = vld [vmem:[%s245] sm:$0xff]
        %v273 = vld [vmem:[%s245 + $0x8] sm:$0xff]
        %v274 = vpack.c.bf16 %v273, %v272
        %v276 = vunpack.c.l.b16 %v274
        %v277 = vunpack.c.h.b16 %v274
        %v278 = vpack.c.b16 %v276, %v276
        %v279 = vpack.c.b16 %v277, %v277
        %vm282 = vcmask 60416
        %283 = vst.msk [vmem:[#allocation2 + $0x4] sm:$0xf] %vm282, %v278
        %284 = vst.msk [vmem:[#allocation2 + $0x8] sm:$0xf] %vm282, %v279
        %v285 = vld [vmem:[%s253 + $0x1] sm:$0x1]
        %v286 = vpack.c.bf16 %v285, %v285
        %vm287 = vcmask 57344
        %vm288 = vsmask.f32 256
        %vm289 = vmand %vm287, %vm288
        %v290 = vld [vmem:[#allocation2 + $0xc] sm:$0x1]
        %v291 = vsel %vm289, %v286, %v290
        %292 = vst [vmem:[#allocation2 + $0xc] sm:$0x1] %v291
        %v293 = vld [vmem:[#allocation2] sm:$0x8]
        %v294 = vld [vmem:[#allocation2 + $0x4] sm:$0xf]
        %v295 = vld [vmem:[#allocation2 + $0x8] sm:$0xf]
        %vm296 = vsmask.f32 4368
        %vm297 = vmor %vm288, %vm296
        %v299 = vshrl.u32 %v293, 16
        %v301 = vrot.slane %v299, 7
        %v302 = vrot.slane %v301, 4
        %v304 = vshrl.u32 %v294, 16
        %v306 = vrot.slane %v304, 7
        %v307 = vshll.u32 %v294, 16
        %v309 = vor.u32 %v306, %v307
        %v310 = vsel %vm297, %v302, %v309
        %v311 = vrot.slane %v306, 4
        %v313 = vshrl.u32 %v295, 16
        %v315 = vrot.slane %v313, 7
        %v316 = vshll.u32 %v295, 16
        %v318 = vor.u32 %v315, %v316
        %v319 = vsel %vm297, %v311, %v318
        %322 = vst.msk [vmem:[#allocation3] sm:$0xf] %vm282, %v310
        %323 = vst.msk [vmem:[#allocation3 + $0x4] sm:$0xf] %vm282, %v319
        %v324 = vld [vmem:[#allocation2 + $0x4] sm:$0xf]
        %v325 = vld [vmem:[#allocation2 + $0x8] sm:$0xf]
        %328 = vrot.lane.b32.xlu0 %v324, 8
        %v329 = vpop.permute.xlu0 %328
        %330 = vrot.lane.b32.xlu0 %v325, 8
        %v331 = vpop.permute.xlu0 %330
        %vm334 = vcmask 126016
        %335 = vst.msk [vmem:[#allocation3] sm:$0xf] %vm334, %v329
        %336 = vst.msk [vmem:[#allocation3 + $0x4] sm:$0xf] %vm334, %v331
        %v337 = vld [vmem:[#allocation2 + $0x4] sm:$0xf]
        %v338 = vld [vmem:[#allocation2 + $0x8] sm:$0xf]
        %v339 = vld [vmem:[#allocation2 + $0xc] sm:$0x1]
        %vm340 = vsmask.f32 3328
        %vm341 = vsmask.f32 7440
        %vm342 = vmor %vm340, %vm341
        %v344 = vshrl.u32 %v337, 16
        %v346 = vrot.slane %v344, 4
        %v347 = vshll.u32 %v337, 16
        %v349 = vrot.slane %v347, 5
        %v350 = vor.u32 %v346, %v349
        %v351 = vrot.slane %v350, 4
        %v353 = vshll.u32 %v338, 16
        %v355 = vrot.slane %v353, 5
        %v356 = vsel %vm342, %v351, %v355
        %v357 = vshrl.u32 %v338, 16
        %v359 = vrot.slane %v357, 4
        %v360 = vor.u32 %v359, %v355
        %v361 = vrot.slane %v360, 4
        %v363 = vshll.u32 %v339, 16
        %v365 = vrot.slane %v363, 5
        %v366 = vsel %vm342, %v361, %v365
        %367 = vrot.lane.b32.xlu0 %v356, 16
        %v368 = vpop.permute.xlu0 %367
        %369 = vrot.lane.b32.xlu0 %v366, 16
        %v370 = vpop.permute.xlu0 %369
        %vm373 = vcmask 191616
        %374 = vst.msk [vmem:[#allocation3] sm:$0xf] %vm373, %v368
        %375 = vst.msk [vmem:[#allocation3 + $0x4] sm:$0xf] %vm373, %v370
        %v376 = vld [vmem:[#allocation3] sm:$0xf]
        %v377 = vld [vmem:[#allocation3 + $0x4] sm:$0xf]
        %v378 = vld [vmem:[%s2] sm:$0xf]
        %v379 = vld [vmem:[%s2 + $0x4] sm:$0xf]
        %v380 = vld [vmem:[%s2 + $0x8] sm:$0xf]
        %v381 = vld [vmem:[%s3] sm:$0x7]
        %v382 = vlaneseq
        %v383 = vshrl.u32 %v382, 7
        %v384 = vsub.s32 0, %v383
        %v385 = vrot.slane %v381, %v384
        %v388 = vunpack.c.l.b16 %v376
        %v389 = vunpack.c.l.b16 %v377
        %v390 = vpack.c.b16 %v389, %v388
        %v394 = vunpack.c.l.b16 %v378
        %v395 = vunpack.c.l.b16 %v379
        %v396 = vunpack.c.l.b16 %v380
        %v397 = vpack.c.b16 %v395, %v394
        %v398 = vpack.c.b16 %v396, %v396
        %vm400 = vcmask 195584
        %v402 = vsel %vm400, %v390, 0
        %vm404 = vcmask 1043456
        %v406 = vsel %vm404, %v398, 0
        %408 = vmatprep.subr.bf16.mxu0 0
        %409 = vmatpush1.bf16.msra.mxu0 0
        %410 = vmatprep.subr.bf16.mxu0 0
        %411 = vmatpush1.bf16.msra.mxu0 0
        %412 = vmatprep.subr.bf16.mxu0 0
        %413 = vmatpush1.bf16.msra.mxu0 0
        %414 = vmatprep.subr.bf16.mxu0 0
        %415 = vmatpush1.bf16.msra.mxu0 0
        %416 = vmatprep.subr.bf16.mxu0 0
        %417 = vmatpush1.bf16.msra.mxu0 0
        %418 = vmatprep.subr.bf16.mxu0 0
        %419 = vmatpush1.bf16.msra.mxu0 0
        %420 = vmatprep.subr.bf16.mxu0 0
        %421 = vmatpush1.bf16.msra.mxu0 %v406
        %422 = vmatprep.subr.bf16.mxu0 0
        %423 = vmatpush1.bf16.msra.mxu0 %v397
        %424 = vmatprep.subr.bf16.mxu0 0
        %425 = vmatpush2.bf16.msra.mxu0 0
        %426 = vmatprep.subr.bf16.mxu0 0
        %427 = vmatpush2.bf16.msra.mxu0 0
        %428 = vmatprep.subr.bf16.mxu0 0
        %429 = vmatpush2.bf16.msra.mxu0 0
        %430 = vmatprep.subr.bf16.mxu0 0
        %431 = vmatpush2.bf16.msra.mxu0 0
        %432 = vmatprep.subr.bf16.mxu0 0
        %433 = vmatpush2.bf16.msra.mxu0 0
        %434 = vmatprep.subr.bf16.mxu0 0
        %435 = vmatpush2.bf16.msra.mxu0 0
        %436 = vmatprep.subr.bf16.mxu0 0
        %437 = vmatpush2.bf16.msra.mxu0 0
        %438 = vmatprep.subr.bf16.mxu0 0
        %439 = vmatpush2.bf16.msra.mxu0 0
        %440 = vmatprep.mubr.bf16.mxu0 0
        %441 = vmatmul.mubr.bf16.gmra.mxu0 %v402
        %v442 = vpop.f32.mrf.mxu0
        %v443 = vadd.f32 %v385, %v442
        %v444 = vpop.f32.mrf.mxu0
        %v445 = vpop.f32.mrf.mxu0
        %v446 = vadd.f32 %v385, %v445
        %v447 = vpop.f32.mrf.mxu0
        %448 = vdwg.mxu0
        %v449 = vmax.f32 %v443, 0.0
        %v450 = vmax.f32 %v446, 0.0
        %vm451 = vcmask 130048
        %v452 = vsel %vm451, %v449, 0.0
        %453 = vadd.xlane.f32.xlu0 %v452
        %v454 = vpop.xlane.xlu0 %453
        %v455 = vsel %vm451, %v450, 0.0
        %456 = vadd.xlane.f32.xlu0 %v455
        %v457 = vpop.xlane.xlu0 %456
        %v458 = vrcp.pop 16.0
        %v459 = vmul.f32 %v454, %v458
        %v460 = vmul.f32 %v457, %v458
        %v461 = vsub.f32 %v449, %v459
        %v462 = vsub.f32 %v450, %v460
        %v463 = vmul.f32 %v461, %v461
        %v464 = vmul.f32 %v462, %v462
        %v465 = vsel %vm451, %v463, 0.0
        %466 = vadd.xlane.f32.xlu0 %v465
        %v467 = vpop.xlane.xlu0 %466
        %v468 = vsel %vm451, %v464, 0.0
        %469 = vadd.xlane.f32.xlu0 %v468
        %v470 = vpop.xlane.xlu0 %469
        %v471 = vmul.f32 %v467, %v458
        %v472 = vmul.f32 %v470, %v458
        %v473 = vadd.f32 %v471, 1e-05
        %v474 = vadd.f32 %v472, 1e-05
        %v475 = vrsqrt.pop %v473
        %v476 = vrsqrt.pop %v474
        %v477 = vmul.f32 %v461, %v475
        %v478 = vmul.f32 %v462, %v476
        %v479 = vlaneseq
        %v480 = vshrl.u32 %v479, 7
        %v481 = vsub.s32 1, %v480
        %v482 = vrot.slane %v381, %v481
        %v483 = vmul.f32 %v477, %v482
        %v484 = vmul.f32 %v478, %v482
        %v485 = vlaneseq
        %v486 = vshrl.u32 %v485, 7
        %v487 = vsub.s32 2, %v486
        %v488 = vrot.slane %v381, %v487
        %v489 = vadd.f32 %v483, %v488
        %v490 = vadd.f32 %v484, %v488
        %491 = vst.msk [vmem:[%s236] sm:$0xff] %vm451, %v489
        %492 = vst.msk [vmem:[%s236 + $0x8] sm:$0xff] %vm451, %v490
        %s493 = sand.u32 %s138, 1
        %s494 = scalar_lea.sflag [#allocation5], %s493
        %s495 = sand.u32 %s138, 1
        %s496 = smul.addr %s495, 16
        %s497 = scalar_lea.vmem [#allocation4], %s496
        // Predicated region
        $region37: #{tdnn_forward.1} parent=35 // pred_check
          %p498 = pneg %p148
        $region38: #{tdnn_forward.1} parent=35 // pred_check_branch
          %500 = sbr.rel (%p498) target = $region40
        $region39: #{tdnn_forward.1} parent=35 // pred_region
          %s501 = smul.u32 2, %s23
          %s503 = ssub.s32 256, 256
          %504 = vsyncadd %s494, %s503
          %s505 = smul.addr %s22, 2
          %s506 = sadd.s32 %s501, %s505
          %s507 = smul.addr %s506, 128
          %s508 = scalar_lea.hbm %s4, %s507
          %s509 = sshll.u32 %s497, 4
          %s510 = int_to_ptr.vmem [resolvable:$true] %s509
          %515 = dma.vmem_to_hbm [thread:$0]  %s510, 256, %s508, %s494, 128, 128, 8
        $region40: #{tdnn_forward.1} parent=35 // pred_fallthru
          _
      $region36: #{tdnn_forward.1} parent=5 // pred_fallthru
        _
      %p516 = scmp.le.s32.totalorder 2, %s13
      // Predicated region
      $region41: #{tdnn_forward.1} parent=5 // pred_check
        %p517 = pneg %p516
      $region42: #{tdnn_forward.1} parent=5 // pred_check_branch
        %519 = sbr.rel (%p517) target = $region44
      $region43: #{tdnn_forward.1} parent=5 // pred_region
        %s520 = ssub.s32 %s13, 2
        // Predicated region
        $region45: #{tdnn_forward.1} parent=43 // pred_check
          %p521 = pneg %p154
        $region46: #{tdnn_forward.1} parent=43 // pred_check_branch
          %523 = sbr.rel (%p521) target = $region48
        $region47: #{tdnn_forward.1} parent=43 // pred_region
          %s524 = sand.u32 %s139, 1
          %s525 = scalar_lea.sflag [#allocation5], %s524
          %s526 = sand.u32 %s139, 1
          %s527 = smul.addr %s526, 16
          %s528 = scalar_lea.vmem [#allocation4], %s527
          %529 = dma.done %s525, 256
        $region48: #{tdnn_forward.1} parent=43 // pred_fallthru
          _
      $region44: #{tdnn_forward.1} parent=5 // pred_fallthru
        _
    $region6: #{tdnn_forward.1} parent=1 // loop_footer
      %s17 = sadd.s32 1, %s13
    $region7: #{tdnn_forward.1} parent=1 // loop_footer_branch
      %12 = sbr.rel target = $region3
    $region8: #{tdnn_forward.1} parent=1 // loop_exit
      _
    %530 = vsyncpa [#allocation5], 1
    %s531 = scalar_lea.sflag [#allocation5], 1
    %532 = vsyncpa %s531, 1

</llo_original>
